<compile_context>
chip_gen: v5e
topology: v5e:2x2
jax: 0.10.0
libtpu: 0.0.40
codegen_flags: <defaults>
</compile_context>

<pallas_src>
import jax
import jax.numpy as jnp
from jax import lax
from jax.experimental import pallas as pl
from jax.experimental.pallas import tpu as pltpu
import numpy as np

SuperNetSetting = [
    [4, 8, 12, 16], [4, 8, 12, 16], [4, 8, 12, 16], [4, 8, 12, 16],
    [4, 8, 12, 16], [4, 8, 12, 16], [4, 8, 12, 16],
    [4, 8, 12, 16, 20, 24, 28, 32], [4, 8, 12, 16, 20, 24, 28, 32],
    [4, 8, 12, 16, 20, 24, 28, 32], [4, 8, 12, 16, 20, 24, 28, 32],
    [4, 8, 12, 16, 20, 24, 28, 32], [4, 8, 12, 16, 20, 24, 28, 32],
    [4, 8, 12, 16, 20, 24, 28, 32, 36, 40, 44, 48, 52, 56, 60, 64],
    [4, 8, 12, 16, 20, 24, 28, 32, 36, 40, 44, 48, 52, 56, 60, 64],
    [4, 8, 12, 16, 20, 24, 28, 32, 36, 40, 44, 48, 52, 56, 60, 64],
    [4, 8, 12, 16, 20, 24, 28, 32, 36, 40, 44, 48, 52, 56, 60, 64],
    [4, 8, 12, 16, 20, 24, 28, 32, 36, 40, 44, 48, 52, 56, 60, 64],
    [4, 8, 12, 16, 20, 24, 28, 32, 36, 40, 44, 48, 52, 56, 60, 64],
    [4, 8, 12, 16, 20, 24, 28, 32, 36, 40, 44, 48, 52, 56, 60, 64],
]

BN_EPS = 1e-5
LANE = 128
VMEM_LIMIT = 32 * 1024 * 1024


def _round_up(x, m):
    return (x + m - 1) // m * m


# ----------------------------- Pallas kernels ------------------------------

def _conv_stats_kernel(p_ref, w_ref, sum_ref, sq_ref):
    """Pass 1: tile matmul + per-channel sum / sum-of-squares accumulation."""
    @pl.when(pl.program_id(0) == 0)
    def _():
        sum_ref[...] = jnp.zeros_like(sum_ref)
        sq_ref[...] = jnp.zeros_like(sq_ref)

    # (TM, K) bf16 x (K, Cp) bf16 -> (TM, Cp) f32 on the MXU.
    acc = jnp.dot(p_ref[...], w_ref[...], preferred_element_type=jnp.float32)
    sum_ref[...] += jnp.sum(acc, axis=0, keepdims=True)
    sq_ref[...] += jnp.sum(acc * acc, axis=0, keepdims=True)


def _conv_norm_kernel(p_ref, w_ref, scale_ref, bias_ref, o_ref):
    """Pass 2: tile matmul + fused BN+mask affine: out = conv*scale + bias."""
    acc = jnp.dot(p_ref[...], w_ref[...], preferred_element_type=jnp.float32)
    o_ref[...] = acc * scale_ref[...] + bias_ref[...]


# -------------------------------- wrapper -----------------------------------

def sample_conv_bn(x, conv_w, mix_weight, layer_id, stride=1, padding=1,
                   lenth=None, tile_m=512, compute_dtype=jnp.bfloat16,
                   return_nhwc=False):
    """x: (N, C_in, H, W) NCHW (like PyTorch). conv_w: (C_out, C_in, kh, kw)."""
    N, C_in, H, W = x.shape
    C_out, _, kh, kw = conv_w.shape
    setting = SuperNetSetting[layer_id]
    assert C_out == setting[-1]

    H_out = (H + 2 * padding - kh) // stride + 1
    W_out = (W + 2 * padding - kw) // stride + 1
    M = N * H_out * W_out
    K = C_in * kh * kw
    C_pad = _round_up(C_out, LANE)          # lane-dense output columns

    tm = min(tile_m, _round_up(M, 8))       # rows per grid step (multiple of 8)
    M_pad = _round_up(M, tm)
    n_tiles = M_pad // tm

    # ---- im2col (plain-JAX glue; bf16 halves the dominant HBM stream) ----
    # TODO(synk): form the kh*kw shifted windows inside the kernel from an
    # NHWC-padded input block to avoid materializing the im2col copy in HBM.
    xp = jnp.pad(x, ((0, 0), (0, 0), (padding, padding), (padding, padding)))
    cols = []
    for ih in range(kh):
        for iw in range(kw):
            cols.append(
                xp[:, :, ih:ih + H_out * stride:stride, iw:iw + W_out * stride:stride]
            )  # (N, C_in, H_out, W_out)
    patches = jnp.stack(cols, axis=2)                         # (N, C_in, kh*kw, Ho, Wo)
    patches = patches.transpose(0, 3, 4, 1, 2).reshape(M, K)  # rows = output pixels
    patches = patches.astype(compute_dtype)
    if M_pad != M:
        patches = jnp.pad(patches, ((0, M_pad - M), (0, 0)))  # zero rows: no effect on sums

    # weights (C_out, C_in, kh, kw) -> (K, C_pad); K-order matches patches.
    w2d = conv_w.reshape(C_out, K).T.astype(compute_dtype)
    w2d = jnp.pad(w2d, ((0, 0), (0, C_pad - C_out)))

    # ---- mixed channel mask (tiny, plain JAX) ----
    masks = np.zeros((len(setting), C_out), dtype=np.float32)
    for i, ch in enumerate(setting):
        masks[i, :ch] = 1.0
    masks = jnp.asarray(masks)
    if lenth is None:
        mixed_mask = jnp.sum(mix_weight[:, None].astype(jnp.float32) * masks, axis=0)
    else:
        assert lenth in setting
        mixed_mask = masks[setting.index(lenth)]
    mixed_mask = jnp.pad(mixed_mask.reshape(1, C_out), ((0, 0), (0, C_pad - C_out)))

    # ---- pass 1: conv matmul + per-channel sum / sumsq ----
    ch_sum, ch_sq = pl.pallas_call(
        _conv_stats_kernel,
        out_shape=(jax.ShapeDtypeStruct((1, C_pad), jnp.float32),
                   jax.ShapeDtypeStruct((1, C_pad), jnp.float32)),
        grid=(n_tiles,),
        in_specs=[
            pl.BlockSpec((tm, K), lambda i: (i, 0)),
            pl.BlockSpec((K, C_pad), lambda i: (0, 0)),
        ],
        out_specs=(pl.BlockSpec((1, C_pad), lambda i: (0, 0)),
                   pl.BlockSpec((1, C_pad), lambda i: (0, 0))),
        compiler_params=pltpu.CompilerParams(
            dimension_semantics=("arbitrary",),           # stats accumulate across tiles
            vmem_limit_bytes=VMEM_LIMIT),
    )(patches, w2d)

    # ---- tiny glue: BN affine with the mask folded in ----
    mean = ch_sum / float(M)
    var = jnp.maximum(ch_sq / float(M) - mean * mean, 0.0)   # biased variance
    inv_std = lax.rsqrt(var + BN_EPS)
    scale = inv_std * mixed_mask                             # (1, C_pad)
    bias = -mean * scale                                     # (1, C_pad)

    # ---- pass 2: conv matmul + fused normalize/mask (row-parallel) ----
    out_pad = pl.pallas_call(
        _conv_norm_kernel,
        out_shape=jax.ShapeDtypeStruct((M_pad, C_pad), jnp.float32),
        grid=(n_tiles,),
        in_specs=[
            pl.BlockSpec((tm, K), lambda i: (i, 0)),
            pl.BlockSpec((K, C_pad), lambda i: (0, 0)),
            pl.BlockSpec((1, C_pad), lambda i: (0, 0)),
            pl.BlockSpec((1, C_pad), lambda i: (0, 0)),
        ],
        out_specs=pl.BlockSpec((tm, C_pad), lambda i: (i, 0)),
        compiler_params=pltpu.CompilerParams(
            dimension_semantics=("parallel",),            # independent row tiles (megacore)
            vmem_limit_bytes=VMEM_LIMIT),
    )(patches, w2d, scale, bias)

    out = out_pad[:M, :C_out].reshape(N, H_out, W_out, C_out)
    if return_nhwc:
        return out
    # NCHW to match the PyTorch module. Per the perf review, prefer
    # return_nhwc=True and keep NHWC through the network to skip this relayout.
    return out.transpose(0, 3, 1, 2)


# ------------------------------- reference ----------------------------------

def _reference(x, conv_w, mix_weight, layer_id, stride=1, padding=1,
               compute_dtype=jnp.bfloat16):
    """Pure-JAX reference mirroring the PyTorch forward. Inputs are round-tripped
    through compute_dtype so the comparison isolates kernel correctness from the
    (intentional) bf16 input quantization."""
    setting = SuperNetSetting[layer_id]
    C_out = conv_w.shape[0]
    xq = x.astype(compute_dtype).astype(jnp.float32)
    wq = conv_w.astype(compute_dtype).astype(jnp.float32)
    conv = lax.conv_general_dilated(
        xq, wq, window_strides=(stride, stride),
        padding=((padding, padding), (padding, padding)),
        dimension_numbers=("NCHW", "OIHW", "NCHW"))
    mean = jnp.mean(conv, axis=(0, 2, 3), keepdims=True)
    var = jnp.mean((conv - mean) ** 2, axis=(0, 2, 3), keepdims=True)
    bn = (conv - mean) * lax.rsqrt(var + BN_EPS)
    masks = np.zeros((len(setting), C_out), dtype=np.float32)
    for i, ch in enumerate(setting):
        masks[i, :ch] = 1.0
    mixed = jnp.sum(mix_weight[:, None] * jnp.asarray(masks), axis=0)
    return bn * mixed.reshape(1, C_out, 1, 1)


if __name__ == "__main__":
    # layer_id=0: out_planes must be SuperNetSetting[0][-1] == 16
    layer_id = 0
    N, C_in, H, W = 2, 4, 16, 16
    C_out, k, stride, padding = 16, 3, 1, 1

    key = jax.random.PRNGKey(0)
    k1, k2, k3 = jax.random.split(key, 3)
    x = jax.random.normal(k1, (N, C_in, H, W), dtype=jnp.float32)
    conv_w = (jax.random.normal(k2, (C_out, C_in, k, k), dtype=jnp.float32)
              * (1.0 / np.sqrt(C_in * k * k)))
    # architecture mixing weights over the 4 candidate widths of layer 0
    mix_weight = jax.nn.softmax(jax.random.normal(
        k3, (len(SuperNetSetting[layer_id]),), dtype=jnp.float32))

    # tile_m=128 on the tiny test shape exercises the multi-tile stats
    # accumulation + parallel normalize path (M = 2*16*16 = 512 -> 4 tiles).
    out = sample_conv_bn(x, conv_w, mix_weight, layer_id,
                         stride=stride, padding=padding, tile_m=128)
    out = jax.block_until_ready(out)

    ref = jax.block_until_ready(
        _reference(x, conv_w, mix_weight, layer_id, stride, padding))
    np.testing.assert_allclose(np.asarray(out), np.asarray(ref),
                               rtol=2e-3, atol=2e-3)

    print("KERNEL_OK")
</pallas_src>

<mosaic_0001>
module attributes {stable_mosaic.version = 11 : i64} {
  func.func @_conv_stats_kernel(%arg0: i32, %arg1: memref<128x36xbf16, #tpu.memory_space<vmem>>, %arg2: memref<36x128xbf16, #tpu.memory_space<vmem>>, %arg3: memref<1x128xf32, #tpu.memory_space<vmem>>, %arg4: memref<1x128xf32, #tpu.memory_space<vmem>>) attributes {dimension_semantics = [#tpu.dimension_semantics<arbitrary>], iteration_bounds = array<i64: 4>, scalar_prefetch = 0 : i64, scratch_operands = 0 : i64, tpu.core_type = #tpu.core_type<tc>, window_params = [{transform_indices = @transform_0, window_bounds = array<i64: 128, 36>}, {pipeline_mode = #tpu.pipeline_mode<synchronous>, transform_indices = @transform_1, window_bounds = array<i64: 36, 128>}, {pipeline_mode = #tpu.pipeline_mode<synchronous>, transform_indices = @transform_2, window_bounds = array<i64: 1, 128>}, {pipeline_mode = #tpu.pipeline_mode<synchronous>, transform_indices = @transform_3, window_bounds = array<i64: 1, 128>}]} {
    %c0_i32 = arith.constant 0 : i32
    %0 = arith.cmpi eq, %arg0, %c0_i32 : i32
    %1 = arith.extui %0 : i1 to i32
    %c0_i32_0 = arith.constant 0 : i32
    %2 = arith.cmpi ne, %1, %c0_i32_0 : i32
    scf.if %2 {
      %cst_14 = arith.constant 0.000000e+00 : f32
      %17 = vector.broadcast %cst_14 : f32 to vector<1x128xf32>
      %c0_15 = arith.constant 0 : index
      %c0_16 = arith.constant 0 : index
      %18 = vector.load %arg3[%c0_15, %c0_16] : memref<1x128xf32, #tpu.memory_space<vmem>>, vector<1x128xf32>
      tpu.vector_store %arg3[%c0_15, %c0_16], %17 {strides = array<i32>} : memref<1x128xf32, #tpu.memory_space<vmem>>, vector<1x128xf32>,
      %cst_17 = arith.constant 0.000000e+00 : f32
      %19 = vector.broadcast %cst_17 : f32 to vector<1x128xf32>
      %c0_18 = arith.constant 0 : index
      %c0_19 = arith.constant 0 : index
      %20 = vector.load %arg4[%c0_18, %c0_19] : memref<1x128xf32, #tpu.memory_space<vmem>>, vector<1x128xf32>
      tpu.vector_store %arg4[%c0_18, %c0_19], %19 {strides = array<i32>} : memref<1x128xf32, #tpu.memory_space<vmem>>, vector<1x128xf32>,
    } else {
    }
    %c0 = arith.constant 0 : index
    %c0_1 = arith.constant 0 : index
    %3 = vector.load %arg1[%c0, %c0_1] : memref<128x36xbf16, #tpu.memory_space<vmem>>, vector<128x36xbf16>
    %c0_2 = arith.constant 0 : index
    %c0_3 = arith.constant 0 : index
    %4 = vector.load %arg2[%c0_2, %c0_3] : memref<36x128xbf16, #tpu.memory_space<vmem>>, vector<36x128xbf16>
    %cst = arith.constant dense<0.000000e+00> : vector<128x128xf32>
    %5 = tpu.matmul %3, %4, %cst {dimension_numbers = #tpu.dot_dimension_numbers<[1], [0], [0], [1], [0, 0, 1, 1], [], []>} : vector<128x36xbf16>, vector<36x128xbf16>, vector<128x128xf32> -> vector<128x128xf32>
    %c0_4 = arith.constant 0 : index
    %c0_5 = arith.constant 0 : index
    %6 = vector.load %arg3[%c0_4, %c0_5] : memref<1x128xf32, #tpu.memory_space<vmem>>, vector<1x128xf32>
    %cst_6 = arith.constant dense<0.000000e+00> : vector<128xf32>
    %7 = vector.multi_reduction <add>, %5, %cst_6 [0] : vector<128x128xf32> to vector<128xf32>
    %8 = vector.shape_cast %7 : vector<128xf32> to vector<1x128xf32>
    %9 = arith.addf %6, %8 : vector<1x128xf32>
    %c0_7 = arith.constant 0 : index
    %c0_8 = arith.constant 0 : index
    %10 = vector.load %arg3[%c0_7, %c0_8] : memref<1x128xf32, #tpu.memory_space<vmem>>, vector<1x128xf32>
    tpu.vector_store %arg3[%c0_7, %c0_8], %9 {strides = array<i32>} : memref<1x128xf32, #tpu.memory_space<vmem>>, vector<1x128xf32>,
    %c0_9 = arith.constant 0 : index
    %c0_10 = arith.constant 0 : index
    %11 = vector.load %arg4[%c0_9, %c0_10] : memref<1x128xf32, #tpu.memory_space<vmem>>, vector<1x128xf32>
    %12 = arith.mulf %5, %5 : vector<128x128xf32>
    %cst_11 = arith.constant dense<0.000000e+00> : vector<128xf32>
    %13 = vector.multi_reduction <add>, %12, %cst_11 [0] : vector<128x128xf32> to vector<128xf32>
    %14 = vector.shape_cast %13 : vector<128xf32> to vector<1x128xf32>
    %15 = arith.addf %11, %14 : vector<1x128xf32>
    %c0_12 = arith.constant 0 : index
    %c0_13 = arith.constant 0 : index
    %16 = vector.load %arg4[%c0_12, %c0_13] : memref<1x128xf32, #tpu.memory_space<vmem>>, vector<1x128xf32>
    tpu.vector_store %arg4[%c0_12, %c0_13], %15 {strides = array<i32>} : memref<1x128xf32, #tpu.memory_space<vmem>>, vector<1x128xf32>,
    return
  }
  func.func @transform_0(%arg0: i32) -> (i32, i32) {
    %c0_i32 = arith.constant 0 : i32
    %c0_i32_0 = arith.constant 0 : i32
    return %arg0, %c0_i32 : i32, i32
  }
  func.func @transform_1(%arg0: i32) -> (i32, i32) {
    %c0_i32 = arith.constant 0 : i32
    %c0_i32_0 = arith.constant 0 : i32
    %c0_i32_1 = arith.constant 0 : i32
    return %c0_i32, %c0_i32_0 : i32, i32
  }
  func.func @transform_2(%arg0: i32) -> (i32, i32) {
    %c0_i32 = arith.constant 0 : i32
    %c0_i32_0 = arith.constant 0 : i32
    %c0_i32_1 = arith.constant 0 : i32
    return %c0_i32, %c0_i32_0 : i32, i32
  }
  func.func @transform_3(%arg0: i32) -> (i32, i32) {
    %c0_i32 = arith.constant 0 : i32
    %c0_i32_0 = arith.constant 0 : i32
    %c0_i32_1 = arith.constant 0 : i32
    return %c0_i32, %c0_i32_0 : i32, i32
  }
}

</mosaic_0001>

<llo_original>
// kernel: tpu_custom_call.1
$region0: #{tpu_custom_call.1}
  #allocation0 [shape = 'u32[]', space=smem, size = 0x4, offset = 0x4, fixed_abs, tag = 'smem constant byte address 0x4 - core index']
  #allocation1 [shape = 'u32[72,128]{1,0:T(1,128)}', space=vmem, size = 0x9000, scoped, tag = 'internal scratch']
  %s0 = inlined_call_operand.vmem [shape: bf16[512,36], index: 0, kind: input, shape index: {}]
  %s1 = inlined_call_operand.vmem [shape: bf16[36,128], index: 1, kind: input, shape index: {}]
  %s2 = inlined_call_operand.hbm [shape: f32[1,128], index: 2, kind: output, shape index: {0}]
  %s3 = inlined_call_operand.hbm [shape: f32[1,128], index: 3, kind: output, shape index: {1}]
  %4 = xla_tuple %s2, %s3
  %s5 = sld [smem:[#allocation0]]
  $region53: #{tpu_custom_call.1} parent=0
    _
  %s7 = ssub.s32 1, %s5
  %s8 = scalar_select 0, %s7, %s5
  $region1: #{tpu_custom_call.1} parent=0
    #allocation2 [shape = 'u8[512]{0}', space=vmem, size = 0x400, scoped, tag = 'output window, operand 0, single buffered']
    #allocation3 [shape = 's32[2]{0}', space=sflag, size = 0x8, scoped, tag = 'scoped memory for tpu_custom_call.1']
    #allocation4 [shape = 'u8[512]{0}', space=vmem, size = 0x400, scoped, tag = 'output window, operand 1, single buffered']
    #allocation5 [shape = 's32[1]{0}', space=sflag, size = 0x4, scoped, tag = 'scoped memory for tpu_custom_call.1']
    %9 = vsyncpa [#allocation3], 0
    %10 = vsyncpa [#allocation5], 0
    loop: start=0, step=1, limit=6
    $region2: #{tpu_custom_call.1} parent=1 // loop_pre_header
      _
    $region3: #{tpu_custom_call.1} parent=1 // loop_header
      %s12 = sphi 0, %s16
      %p13 = scmp.ge.s32.totalorder %s12, 6
      %s22 = sphi 0, %s24
      %s25 = sphi 0, %s22
      %s26 = sphi 0, %s25
      %s42 = sphi 0, %s26
      %s46 = sphi 0, %s46
      %s48 = sphi 0, %s46
      %s49 = sphi 0, %s48
      %s63 = sphi 0, %s49
      %s67 = sphi 0, %s67
      %s69 = sphi 0, %s67
      %s70 = sphi 0, %s69
      %s84 = sphi 0, %s70
      %s88 = sphi 0, %s88
      %s90 = sphi 0, %s88
      %s91 = sphi 0, %s90
      %s105 = sphi 0, %s91
    $region4: #{tpu_custom_call.1} parent=1 // loop_header_branch
      %15 = sbr.rel (%p13) target = $region8
    $region5: #{tpu_custom_call.1} parent=1 // loop_body
      %s17 = ssub.s32 %s12, 1
      %s18 = ssub.s32 %s12, 2
      %s19 = sadd.s32 %s12, 1
      %s20 = ssub.s32 %s12, %s19
      %p21 = scmp.eq.s32.totalorder %s20, 0
      %s23 = sadd.s32 %s22, 1
      %s24 = scalar_select %p21, %s22, %s23
      %p27 = pneg %p21
      %p28 = scmp.eq.s32.totalorder %s12, 3
      %p29 = por %p27, %p28
      %p30 = scmp.ne.s32.totalorder %s22, %s25
      %p31 = scmp.eq.s32.totalorder %s12, 0
      %p32 = por %p30, %p31
      %p33 = scmp.ne.s32.totalorder %s22, %s25
      %p34 = scmp.eq.s32.totalorder %s17, 3
      %p35 = por %p33, %p34
      %p36 = scmp.ne.s32.totalorder %s25, %s26
      %p37 = scmp.eq.s32.totalorder %s17, 0
      %p38 = por %p36, %p37
      %p39 = scmp.ne.s32.totalorder %s25, %s26
      %p40 = scmp.eq.s32.totalorder %s18, 3
      %p41 = por %p39, %p40
      %p43 = scmp.ne.s32.totalorder %s26, %s42
      %p44 = scmp.eq.s32.totalorder %s18, 0
      %p45 = por %p43, %p44
      %s47 = sadd.s32 %s46, 1
      %p50 = scmp.eq.s32.totalorder %s12, 3
      %p51 = scmp.ne.s32.totalorder %s46, %s48
      %p52 = scmp.eq.s32.totalorder %s12, 0
      %p53 = por %p51, %p52
      %p54 = scmp.ne.s32.totalorder %s46, %s48
      %p55 = scmp.eq.s32.totalorder %s17, 3
      %p56 = por %p54, %p55
      %p57 = scmp.ne.s32.totalorder %s48, %s49
      %p58 = scmp.eq.s32.totalorder %s17, 0
      %p59 = por %p57, %p58
      %p60 = scmp.ne.s32.totalorder %s48, %s49
      %p61 = scmp.eq.s32.totalorder %s18, 3
      %p62 = por %p60, %p61
      %p64 = scmp.ne.s32.totalorder %s49, %s63
      %p65 = scmp.eq.s32.totalorder %s18, 0
      %p66 = por %p64, %p65
      %s68 = sadd.s32 %s67, 1
      %p71 = scmp.eq.s32.totalorder %s12, 3
      %p72 = scmp.ne.s32.totalorder %s67, %s69
      %p73 = scmp.eq.s32.totalorder %s12, 0
      %p74 = por %p72, %p73
      %p75 = scmp.ne.s32.totalorder %s67, %s69
      %p76 = scmp.eq.s32.totalorder %s17, 3
      %p77 = por %p75, %p76
      %p78 = scmp.ne.s32.totalorder %s69, %s70
      %p79 = scmp.eq.s32.totalorder %s17, 0
      %p80 = por %p78, %p79
      %p81 = scmp.ne.s32.totalorder %s69, %s70
      %p82 = scmp.eq.s32.totalorder %s18, 3
      %p83 = por %p81, %p82
      %p85 = scmp.ne.s32.totalorder %s70, %s84
      %p86 = scmp.eq.s32.totalorder %s18, 0
      %p87 = por %p85, %p86
      %s89 = sadd.s32 %s88, 1
      %p92 = scmp.eq.s32.totalorder %s12, 3
      %p93 = scmp.ne.s32.totalorder %s88, %s90
      %p94 = scmp.eq.s32.totalorder %s12, 0
      %p95 = por %p93, %p94
      %p96 = scmp.ne.s32.totalorder %s88, %s90
      %p97 = scmp.eq.s32.totalorder %s17, 3
      %p98 = por %p96, %p97
      %p99 = scmp.ne.s32.totalorder %s90, %s91
      %p100 = scmp.eq.s32.totalorder %s17, 0
      %p101 = por %p99, %p100
      %p102 = scmp.ne.s32.totalorder %s90, %s91
      %p103 = scmp.eq.s32.totalorder %s18, 3
      %p104 = por %p102, %p103
      %p106 = scmp.ne.s32.totalorder %s91, %s105
      %p107 = scmp.eq.s32.totalorder %s18, 0
      %p108 = por %p106, %p107
      %p109 = scmp.le.s32.totalorder 1, %s12
      %p110 = scmp.lt.s32.totalorder %s12, 5
      %p111 = pnand %p109, %p110
      %p112 = pneg %p111
      // Predicated region
      $region9: #{tpu_custom_call.1} parent=5 // pred_check
        _
      $region10: #{tpu_custom_call.1} parent=5 // pred_check_branch
        %114 = sbr.rel (%p111) target = $region12
      $region11: #{tpu_custom_call.1} parent=5 // pred_region
        %s115 = ssub.s32 %s12, 1
        // Predicated region
        $region13: #{tpu_custom_call.1} parent=11 // pred_check
          %p116 = pneg %p59
        $region14: #{tpu_custom_call.1} parent=11 // pred_check_branch
          %118 = sbr.rel (%p116) target = $region16
        $region15: #{tpu_custom_call.1} parent=11 // pred_region
          _
        $region16: #{tpu_custom_call.1} parent=11 // pred_fallthru
          _
      $region12: #{tpu_custom_call.1} parent=5 // pred_fallthru
        _
      %p119 = scmp.lt.s32.totalorder %s12, 4
      // Predicated region
      $region17: #{tpu_custom_call.1} parent=5 // pred_check
        %p120 = pneg %p119
      $region18: #{tpu_custom_call.1} parent=5 // pred_check_branch
        %122 = sbr.rel (%p120) target = $region20
      $region19: #{tpu_custom_call.1} parent=5 // pred_region
        // Predicated region
        $region21: #{tpu_custom_call.1} parent=19 // pred_check
          %p123 = pneg %p32
        $region22: #{tpu_custom_call.1} parent=19 // pred_check_branch
          %125 = sbr.rel (%p123) target = $region24
        $region23: #{tpu_custom_call.1} parent=19 // pred_region
          %s126 = smul.u32 16, %s12
          %p127 = scmp.lt.s32.totalorder %s126, 63
          %s128 = scalar_select %p127, %s126, 63
          %s129 = smul.addr %s128, 4
          %s130 = scalar_lea.vmem %s0, %s129
          %s131 = smul.u32 16, %s12
        $region24: #{tpu_custom_call.1} parent=19 // pred_fallthru
          _
      $region20: #{tpu_custom_call.1} parent=5 // pred_fallthru
        _
      %p132 = scmp.le.s32.totalorder 1, %s12
      %p133 = scmp.lt.s32.totalorder %s12, 5
      %p134 = pnand %p132, %p133
      %p135 = pneg %p134
      // Predicated region
      $region25: #{tpu_custom_call.1} parent=5 // pred_check
        _
      $region26: #{tpu_custom_call.1} parent=5 // pred_check_branch
        %137 = sbr.rel (%p134) target = $region28
      $region27: #{tpu_custom_call.1} parent=5 // pred_region
        %s138 = ssub.s32 %s12, 1
        %s139 = smul.u32 16, %s17
        %p140 = scmp.lt.s32.totalorder %s139, 63
        %s141 = scalar_select %p140, %s139, 63
        %s142 = smul.addr %s141, 4
        %s143 = scalar_lea.vmem %s0, %s142
        %p144 = pneg %p38
        %p145 = pneg %p35
        %p146 = pneg %p59
        %p147 = pneg %p56
        %p148 = pneg %p80
        %p149 = pneg %p77
        %p150 = pneg %p101
        %p151 = pneg %p98
        %s152 = smul.u32 16, %s17
        %p153 = scmp.lt.s32.totalorder %s152, 63
        %s154 = scalar_select %p153, %s152, 63
        %s155 = smul.addr %s154, 4
        %s156 = scalar_lea.vmem %s0, %s155
        %s157 = smul.u32 16, %s17
        %p159 = scmp.eq.s32.totalorder %s17, 0
        // Predicated region
        $region29: #{tpu_custom_call.1} parent=27 // pred_check
          %p160 = pneg %p159
        $region30: #{tpu_custom_call.1} parent=27 // pred_check_branch
          %162 = sbr.rel (%p160) target = $region32
        $region31: #{tpu_custom_call.1} parent=27 // pred_region
          %163 = vst [vmem:[#allocation2] sm:$0x1] 0.0
          %164 = vst [vmem:[#allocation4] sm:$0x1] 0.0
        $region32: #{tpu_custom_call.1} parent=27 // pred_fallthru
          _
        %v165 = vld [vmem:[%s156] sm:$0xf]
        %v166 = vld [vmem:[%s156 + $0x4] sm:$0xf]
        %v167 = vld [vmem:[%s156 + $0x8] sm:$0xf]
        %v168 = vld [vmem:[%s156 + $0xc] sm:$0xf]
        %v169 = vld [vmem:[%s156 + $0x10] sm:$0xf]
        %v170 = vld [vmem:[%s156 + $0x14] sm:$0xf]
        %v171 = vld [vmem:[%s156 + $0x18] sm:$0xf]
        %v172 = vld [vmem:[%s156 + $0x1c] sm:$0xf]
        %v173 = vld [vmem:[%s156 + $0x20] sm:$0xf]
        %v174 = vld [vmem:[%s156 + $0x24] sm:$0xf]
        %v175 = vld [vmem:[%s156 + $0x28] sm:$0xf]
        %v176 = vld [vmem:[%s156 + $0x2c] sm:$0xf]
        %v177 = vld [vmem:[%s156 + $0x30] sm:$0xf]
        %v178 = vld [vmem:[%s156 + $0x34] sm:$0xf]
        %v179 = vld [vmem:[%s156 + $0x38] sm:$0xf]
        %v180 = vld [vmem:[%s156 + $0x3c] sm:$0xf]
        %v181 = vld [vmem:[%s1] sm:$0xf]
        %v182 = vld [vmem:[%s1 + $0x4] sm:$0xf]
        %v183 = vld [vmem:[%s1 + $0x8] sm:$0xf]
        %v184 = vld [vmem:[%s1 + $0xc] sm:$0xf]
        %v185 = vld [vmem:[%s1 + $0x10] sm:$0x3]
        %v202 = vunpack.c.l.b16 %v165
        %v203 = vunpack.c.l.b16 %v166
        %v204 = vunpack.c.l.b16 %v167
        %v205 = vunpack.c.l.b16 %v168
        %v206 = vunpack.c.l.b16 %v169
        %v207 = vunpack.c.l.b16 %v170
        %v208 = vunpack.c.l.b16 %v171
        %v209 = vunpack.c.l.b16 %v172
        %v210 = vunpack.c.l.b16 %v173
        %v211 = vunpack.c.l.b16 %v174
        %v212 = vunpack.c.l.b16 %v175
        %v213 = vunpack.c.l.b16 %v176
        %v214 = vunpack.c.l.b16 %v177
        %v215 = vunpack.c.l.b16 %v178
        %v216 = vunpack.c.l.b16 %v179
        %v217 = vunpack.c.l.b16 %v180
        %v218 = vpack.c.b16 %v203, %v202
        %v219 = vpack.c.b16 %v205, %v204
        %v220 = vpack.c.b16 %v207, %v206
        %v221 = vpack.c.b16 %v209, %v208
        %v222 = vpack.c.b16 %v211, %v210
        %v223 = vpack.c.b16 %v213, %v212
        %v224 = vpack.c.b16 %v215, %v214
        %v225 = vpack.c.b16 %v217, %v216
        %v231 = vunpack.c.l.b16 %v181
        %v232 = vunpack.c.l.b16 %v182
        %v233 = vunpack.c.l.b16 %v183
        %v234 = vunpack.c.l.b16 %v184
        %v235 = vunpack.c.l.b16 %v185
        %v236 = vpack.c.b16 %v232, %v231
        %v237 = vpack.c.b16 %v234, %v233
        %v238 = vpack.c.b16 %v235, %v235
        %vm241 = vcmask 293888
        %v243 = vsel %vm241, %v218, 0
        %v246 = vsel %vm241, %v219, 0
        %v249 = vsel %vm241, %v220, 0
        %v252 = vsel %vm241, %v221, 0
        %v255 = vsel %vm241, %v222, 0
        %v258 = vsel %vm241, %v223, 0
        %v261 = vsel %vm241, %v224, 0
        %v264 = vsel %vm241, %v225, 0
        %vm266 = vcmask 1041408
        %v268 = vsel %vm266, %v238, 0
        %270 = vmatpush.bf16.msra.mxu0 0
        %271 = vmatpush.bf16.msra.mxu0 0
        %272 = vmatpush.bf16.msra.mxu0 0
        %273 = vmatpush.bf16.msra.mxu0 0
        %274 = vmatpush.bf16.msra.mxu0 0
        %275 = vmatpush.bf16.msra.mxu0 %v268
        %276 = vmatpush.bf16.msra.mxu0 %v237
        %277 = vmatpush.bf16.msra.mxu0 %v236
        %278 = vmatmul.bf16.gmra.mxu0 %v243
        %v279 = vpop.f32.mrf.mxu0
        %v280 = vadd.f32 0.0, %v279
        %v281 = vpop.f32.mrf.mxu0
        %v282 = vadd.f32 0.0, %v281
        %283 = vmatmul.bf16.gmra.mxu0 %v246
        %v284 = vpop.f32.mrf.mxu0
        %v285 = vadd.f32 0.0, %v284
        %v286 = vpop.f32.mrf.mxu0
        %v287 = vadd.f32 0.0, %v286
        %288 = vmatmul.bf16.gmra.mxu0 %v249
        %v289 = vpop.f32.mrf.mxu0
        %v290 = vadd.f32 0.0, %v289
        %v291 = vpop.f32.mrf.mxu0
        %v292 = vadd.f32 0.0, %v291
        %293 = vmatmul.bf16.gmra.mxu0 %v252
        %v294 = vpop.f32.mrf.mxu0
        %v295 = vadd.f32 0.0, %v294
        %v296 = vpop.f32.mrf.mxu0
        %v297 = vadd.f32 0.0, %v296
        %298 = vmatmul.bf16.gmra.mxu0 %v255
        %v299 = vpop.f32.mrf.mxu0
        %v300 = vadd.f32 0.0, %v299
        %v301 = vpop.f32.mrf.mxu0
        %v302 = vadd.f32 0.0, %v301
        %303 = vmatmul.bf16.gmra.mxu0 %v258
        %v304 = vpop.f32.mrf.mxu0
        %v305 = vadd.f32 0.0, %v304
        %v306 = vpop.f32.mrf.mxu0
        %v307 = vadd.f32 0.0, %v306
        %308 = vmatmul.bf16.gmra.mxu0 %v261
        %v309 = vpop.f32.mrf.mxu0
        %v310 = vadd.f32 0.0, %v309
        %v311 = vpop.f32.mrf.mxu0
        %v312 = vadd.f32 0.0, %v311
        %313 = vmatmul.bf16.gmra.mxu0 %v264
        %v314 = vpop.f32.mrf.mxu0
        %v315 = vadd.f32 0.0, %v314
        %v316 = vpop.f32.mrf.mxu0
        %v317 = vadd.f32 0.0, %v316
        %318 = vdwg.mxu0
        %v319 = vld [vmem:[#allocation2] sm:$0x1]
        %v320 = vadd.f32 %v280, %v282
        %v321 = vadd.f32 %v320, %v285
        %v322 = vadd.f32 %v321, %v287
        %v323 = vadd.f32 %v322, %v290
        %v324 = vadd.f32 %v323, %v292
        %v325 = vadd.f32 %v324, %v295
        %v326 = vadd.f32 %v325, %v297
        %v327 = vadd.f32 %v326, %v300
        %v328 = vadd.f32 %v327, %v302
        %v329 = vadd.f32 %v328, %v305
        %v330 = vadd.f32 %v329, %v307
        %v331 = vadd.f32 %v330, %v310
        %v332 = vadd.f32 %v331, %v312
        %v333 = vadd.f32 %v332, %v315
        %v334 = vadd.f32 %v333, %v317
        %v335 = vrot.slane %v334, 4
        %v336 = vadd.f32 %v334, %v335
        %v337 = vrot.slane %v336, 2
        %v338 = vadd.f32 %v336, %v337
        %v339 = vrot.slane %v338, 1
        %v340 = vadd.f32 %v338, %v339
        %v341 = vadd.f32 %v319, %v340
        %342 = vst [vmem:[#allocation2] sm:$0x1] %v341
        %v343 = vld [vmem:[#allocation4] sm:$0x1]
        %v344 = vmul.f32 %v280, %v280
        %v345 = vmul.f32 %v282, %v282
        %v346 = vmul.f32 %v285, %v285
        %v347 = vmul.f32 %v287, %v287
        %v348 = vmul.f32 %v290, %v290
        %v349 = vmul.f32 %v292, %v292
        %v350 = vmul.f32 %v295, %v295
        %v351 = vmul.f32 %v297, %v297
        %v352 = vmul.f32 %v300, %v300
        %v353 = vmul.f32 %v302, %v302
        %v354 = vmul.f32 %v305, %v305
        %v355 = vmul.f32 %v307, %v307
        %v356 = vmul.f32 %v310, %v310
        %v357 = vmul.f32 %v312, %v312
        %v358 = vmul.f32 %v315, %v315
        %v359 = vmul.f32 %v317, %v317
        %v360 = vadd.f32 %v344, %v345
        %v361 = vadd.f32 %v360, %v346
        %v362 = vadd.f32 %v361, %v347
        %v363 = vadd.f32 %v362, %v348
        %v364 = vadd.f32 %v363, %v349
        %v365 = vadd.f32 %v364, %v350
        %v366 = vadd.f32 %v365, %v351
        %v367 = vadd.f32 %v366, %v352
        %v368 = vadd.f32 %v367, %v353
        %v369 = vadd.f32 %v368, %v354
        %v370 = vadd.f32 %v369, %v355
        %v371 = vadd.f32 %v370, %v356
        %v372 = vadd.f32 %v371, %v357
        %v373 = vadd.f32 %v372, %v358
        %v374 = vadd.f32 %v373, %v359
        %v375 = vrot.slane %v374, 4
        %v376 = vadd.f32 %v374, %v375
        %v377 = vrot.slane %v376, 2
        %v378 = vadd.f32 %v376, %v377
        %v379 = vrot.slane %v378, 1
        %v380 = vadd.f32 %v378, %v379
        %v381 = vadd.f32 %v343, %v380
        %382 = vst [vmem:[#allocation4] sm:$0x1] %v381
        // Predicated region
        $region33: #{tpu_custom_call.1} parent=27 // pred_check
          %p383 = pneg %p77
        $region34: #{tpu_custom_call.1} parent=27 // pred_check_branch
          %385 = sbr.rel (%p383) target = $region36
        $region35: #{tpu_custom_call.1} parent=27 // pred_region
          %387 = vsyncadd [#allocation3], 0
          %s389 = sshll.u32 [#allocation2], 4
          %s390 = int_to_ptr.vmem [resolvable:$true] %s389
          %s391 = sshll.u32 %s2, 4
          %s392 = int_to_ptr.hbm [resolvable:$true] %s391
          %394 = dma.vmem_to_hbm [thread:$0]  %s390, 16, %s392, [#allocation3]
        $region36: #{tpu_custom_call.1} parent=27 // pred_fallthru
          _
        // Predicated region
        $region37: #{tpu_custom_call.1} parent=27 // pred_check
          %p395 = pneg %p98
        $region38: #{tpu_custom_call.1} parent=27 // pred_check_branch
          %397 = sbr.rel (%p395) target = $region40
        $region39: #{tpu_custom_call.1} parent=27 // pred_region
          %399 = vsyncadd [#allocation5], 0
          %s401 = sshll.u32 [#allocation4], 4
          %s402 = int_to_ptr.vmem [resolvable:$true] %s401
          %s403 = sshll.u32 %s3, 4
          %s404 = int_to_ptr.hbm [resolvable:$true] %s403
          %406 = dma.vmem_to_hbm [thread:$0]  %s402, 16, %s404, [#allocation5]
        $region40: #{tpu_custom_call.1} parent=27 // pred_fallthru
          _
        // Predicated region
        $region41: #{tpu_custom_call.1} parent=27 // pred_check
          %p407 = pneg %p77
        $region42: #{tpu_custom_call.1} parent=27 // pred_check_branch
          %409 = sbr.rel (%p407) target = $region44
        $region43: #{tpu_custom_call.1} parent=27 // pred_region
          %411 = dma.done [#allocation3], 16
        $region44: #{tpu_custom_call.1} parent=27 // pred_fallthru
          _
        // Predicated region
        $region45: #{tpu_custom_call.1} parent=27 // pred_check
          %p412 = pneg %p98
        $region46: #{tpu_custom_call.1} parent=27 // pred_check_branch
          %414 = sbr.rel (%p412) target = $region48
        $region47: #{tpu_custom_call.1} parent=27 // pred_region
          %416 = dma.done [#allocation5], 16
        $region48: #{tpu_custom_call.1} parent=27 // pred_fallthru
          _
      $region28: #{tpu_custom_call.1} parent=5 // pred_fallthru
        _
      %p417 = scmp.le.s32.totalorder 2, %s12
      // Predicated region
      $region49: #{tpu_custom_call.1} parent=5 // pred_check
        %p418 = pneg %p417
      $region50: #{tpu_custom_call.1} parent=5 // pred_check_branch
        %420 = sbr.rel (%p418) target = $region52
      $region51: #{tpu_custom_call.1} parent=5 // pred_region
        %s421 = ssub.s32 %s12, 2
      $region52: #{tpu_custom_call.1} parent=5 // pred_fallthru
        _
    $region6: #{tpu_custom_call.1} parent=1 // loop_footer
      %s16 = sadd.s32 1, %s12
    $region7: #{tpu_custom_call.1} parent=1 // loop_footer_branch
      %11 = sbr.rel target = $region3
    $region8: #{tpu_custom_call.1} parent=1 // loop_exit
      _
    %422 = vsyncpa [#allocation3], 1
    %s423 = scalar_lea.sflag [#allocation3], 1
    %424 = vsyncpa %s423, 1
    %425 = vsyncpa [#allocation5], 1

</llo_original>
